<compile_context>
chip_gen: v5e
topology: v5e:2x2
jax: 0.10.0
libtpu: 0.0.40
codegen_flags: <defaults>
</compile_context>

<pallas_src>
import jax
import jax.numpy as jnp
from jax import lax
from jax.experimental import pallas as pl
from jax.experimental.pallas import tpu as pltpu

BN_EPS = 1e-5
LANE = 128
# Safe on every generation (v7x scoped VMEM tops out around 32 MiB; v5e/v6e allow
# more once tiles grow, but this kernel needs well under 1 MiB per grid step).
VMEM_LIMIT_BYTES = 32 * 1024 * 1024


def _round_up(x, m):
    return (x + m - 1) // m * m


# ----------------------------------------------------------------------- kernels
def conv_stats_kernel(x_ref, wb_ref, conv_ref, sum_ref, ssq_ref):
    """One (batch, row-tile) grid step: conv tile + lane-dense partial BN sums.

    x_ref:    (Hp, WpCp)       zero-padded image of this batch element, f32,
                               (width, Cin) packed on the lane axis, padded to 128.
    wb_ref:   (KH, WpCp, WoC)  width-Toeplitz conv weights (f32 or bf16).
    conv_ref: (TH, WoC)        conv output tile, f32, lane-dense (WoC = Wo*Cout).
    sum_ref:  (1, WoC)         per-tile, per-output-column sum        (lane-dense).
    ssq_ref:  (1, WoC)         per-tile, per-output-column sum of x^2 (lane-dense).
    """
    t = pl.program_id(1)
    KH = wb_ref.shape[0]
    TH, _ = conv_ref.shape
    cdt = wb_ref.dtype
    row0 = pl.multiple_of(t * TH, 8)

    # ky = 0 initialises the accumulator (no zero-fill + add).  Each tap is loaded
    # directly with its own dynamic slice -- no overlapping in-register slab slices.
    acc = jnp.dot(x_ref[pl.ds(row0, TH), :].astype(cdt), wb_ref[0],
                  preferred_element_type=jnp.float32)
    for ky in range(1, KH):                       # static unroll, KH == 3
        acc = acc + jnp.dot(x_ref[pl.ds(row0 + ky, TH), :].astype(cdt), wb_ref[ky],
                            preferred_element_type=jnp.float32)
    conv_ref[...] = acc

    # BN partial statistics: sublane reduction only (rides the XLU slot, MXU stays
    # free); lane -> channel pooling + mean/var are finished in the XLA epilogue.
    sum_ref[...] = jnp.sum(acc, axis=0, keepdims=True)
    ssq_ref[...] = jnp.sum(acc * acc, axis=0, keepdims=True)


def bn_relu_kernel(conv_ref, scale_ref, shift_ref, o_ref):
    """y = relu(conv * scale + shift); scale/shift are lane-tiled per channel."""
    o_ref[...] = jnp.maximum(conv_ref[...] * scale_ref[...] + shift_ref[...], 0.0)


# ----------------------------------------------------------------------- weights
def prepare_conv_weights(w_oihw, in_width, *, pad_w=1, compute_dtype=jnp.bfloat16):
    """Build the width-Toeplitz ("banded") weight once per weight update.

    wband[ky, p*Cin+ci, w*Cout+co] = W[co, ci, ky, p-w] if 0 <= p-w < KW else 0.
    The packed (width * Cin) axis is zero-padded up to a multiple of 128 lanes so the
    in-kernel activation loads are lane-dense; the extra rows are zero, so the matmul
    result is unchanged.
    """
    Cout, Cin, KH, KW = w_oihw.shape
    Wp = in_width + 2 * pad_w
    Wo = Wp - KW + 1
    WpC = Wp * Cin
    WpCp = _round_up(WpC, LANE)

    w_hwio = jnp.transpose(w_oihw, (2, 3, 1, 0)).astype(jnp.float32)  # (KH,KW,Cin,Cout)
    p_idx = jnp.arange(Wp)[None, :, None]
    w_idx = jnp.arange(Wo)[:, None, None]
    k_idx = jnp.arange(KW)[None, None, :]
    taps = (p_idx == w_idx + k_idx).astype(jnp.float32)               # (Wo, Wp, KW)
    wband = jnp.einsum("wpk,ykio->ypiwo", taps, w_hwio)               # (KH,Wp,Cin,Wo,Cout)
    wband = wband.reshape(KH, WpC, Wo * Cout)
    if WpCp > WpC:
        wband = jnp.pad(wband, ((0, 0), (0, WpCp - WpC), (0, 0)))
    # Note: for large W / Cin this band wastes ~(Wp-KW)/Wp of the MXU K dimension;
    # a dense-K (KW*Cin) im2col formulation is the right generalization.
    return wband.astype(compute_dtype)


# ----------------------------------------------------------------------- wrapper
def conv_bn_relu(x_nchw, wband, gamma, beta, *, padding=(1, 1), row_tile=16):
    """x_nchw: (N, Cin, H, W); wband from prepare_conv_weights(). Returns NCHW f32."""
    N, Cin, H, W = x_nchw.shape
    Cout = gamma.shape[0]
    KH, WpCp, WoC = wband.shape
    ph, pw = padding
    Hp, Wp = H + 2 * ph, W + 2 * pw
    Ho = Hp - KH + 1
    Wo = WoC // Cout
    WpC = Wp * Cin
    assert WoC % Cout == 0 and WpCp == _round_up(WpC, LANE), "wband/input shape mismatch"

    TH = min(row_tile, Ho)
    assert Ho % TH == 0 and TH % 8 == 0, \
        "row tile must divide the output height and be a multiple of 8"
    nT = Ho // TH
    NR = N * Ho

    # VMEM gate for the whole-image input block (double-buffered).  A few KiB here;
    # for large images switch x to row-slab blocks with a manual halo DMA
    # (memory_space=pl.ANY + pltpu.make_async_copy) instead of whole-image blocks.
    itemsize = jnp.dtype(wband.dtype).itemsize
    vmem_per_step = (2 * Hp * WpCp * 4 + 2 * KH * WpCp * WoC * itemsize
                     + 2 * TH * WoC * 4 + 4 * WoC * 4)
    assert vmem_per_step < VMEM_LIMIT_BYTES, "whole-image x block would overflow VMEM"

    # Layout glue (only because the contract is NCHW): NCHW -> NHWC, zero-pad
    # spatially, pack (width, Cin) onto the lane axis, pad lanes to 128.
    x_nhwc = jnp.transpose(x_nchw, (0, 2, 3, 1)).astype(jnp.float32)
    x_pack = jnp.pad(x_nhwc, ((0, 0), (ph, ph), (pw, pw), (0, 0))).reshape(N, Hp, WpC)
    if WpCp > WpC:
        x_pack = jnp.pad(x_pack, ((0, 0), (0, 0), (0, WpCp - WpC)))

    conv, sums, ssqs = pl.pallas_call(
        conv_stats_kernel,
        grid=(N, nT),
        in_specs=[
            pl.BlockSpec((None, Hp, WpCp), lambda n, t: (n, 0, 0)),   # per-batch image
            pl.BlockSpec((KH, WpCp, WoC), lambda n, t: (0, 0, 0)),    # resident weights
        ],
        out_specs=(
            pl.BlockSpec((TH, WoC), lambda n, t: (n * nT + t, 0)),
            pl.BlockSpec((None, None, 1, WoC), lambda n, t: (n, t, 0, 0)),
            pl.BlockSpec((None, None, 1, WoC), lambda n, t: (n, t, 0, 0)),
        ),
        out_shape=(
            jax.ShapeDtypeStruct((NR, WoC), jnp.float32),
            jax.ShapeDtypeStruct((N, nT, 1, WoC), jnp.float32),
            jax.ShapeDtypeStruct((N, nT, 1, WoC), jnp.float32),
        ),
        compiler_params=pltpu.CompilerParams(
            dimension_semantics=("parallel", "parallel"),
            vmem_limit_bytes=VMEM_LIMIT_BYTES),
    )(x_pack, wband)

    # Finish BN statistics (tiny XLA): lane -> channel pooling, mean/var, and fold
    # gamma/beta into per-channel scale/shift.  Single-pass E[x^2]-E[x]^2 with a
    # clamp; fine here since |mean| << std for a conv fed zero-mean activations.
    count = float(NR * Wo)
    s_tot = jnp.sum(sums.reshape(-1, Wo, Cout), axis=(0, 1))
    q_tot = jnp.sum(ssqs.reshape(-1, Wo, Cout), axis=(0, 1))
    mean = s_tot / count
    var = jnp.maximum(q_tot / count - mean * mean, 0.0)
    scale = gamma.astype(jnp.float32) * lax.rsqrt(var + BN_EPS)
    shift = beta.astype(jnp.float32) - mean * scale
    scale_row = jnp.tile(scale, Wo).reshape(1, WoC)   # lane-aligned with conv columns
    shift_row = jnp.tile(shift, Wo).reshape(1, WoC)

    # BN apply + ReLU.  Largest block that fits (one grid step at this size); the
    # output aliases the conv intermediate so no extra HBM buffer is allocated.
    BT = min(NR, 512)
    assert NR % BT == 0 and BT % 8 == 0
    y = pl.pallas_call(
        bn_relu_kernel,
        grid=(NR // BT,),
        in_specs=[
            pl.BlockSpec((BT, WoC), lambda r: (r, 0)),
            pl.BlockSpec((1, WoC), lambda r: (0, 0)),
            pl.BlockSpec((1, WoC), lambda r: (0, 0)),
        ],
        out_specs=pl.BlockSpec((BT, WoC), lambda r: (r, 0)),
        out_shape=jax.ShapeDtypeStruct((NR, WoC), jnp.float32),
        input_output_aliases={0: 0},
        compiler_params=pltpu.CompilerParams(
            dimension_semantics=("parallel",),
            vmem_limit_bytes=VMEM_LIMIT_BYTES),
    )(conv, scale_row, shift_row)

    # Back to the PyTorch NCHW contract (skipped in an NHWC pipeline).
    return y.reshape(N, Ho, Wo, Cout).transpose(0, 3, 1, 2)


# ----------------------------------------------------------------------- reference
def reference(x_nchw, w_oihw, gamma, beta):
    conv = lax.conv_general_dilated(
        x_nchw.astype(jnp.float32), w_oihw.astype(jnp.float32),
        window_strides=(1, 1), padding=((1, 1), (1, 1)),
        dimension_numbers=("NCHW", "OIHW", "NCHW"),
        precision=lax.Precision.HIGHEST)
    mean = jnp.mean(conv, axis=(0, 2, 3), keepdims=True)
    var = jnp.mean((conv - mean) ** 2, axis=(0, 2, 3), keepdims=True)
    y = (conv - mean) * lax.rsqrt(var + BN_EPS)
    y = y * gamma.reshape(1, -1, 1, 1) + beta.reshape(1, -1, 1, 1)
    return jnp.maximum(y, 0.0)


if __name__ == "__main__":
    # ConvBn2d(in_channels=4, out_channels=8) at small spatial size.
    N, Cin, H, W = 2, 4, 16, 16
    Cout, KH, KW = 8, 3, 3

    key = jax.random.PRNGKey(0)
    k_x, k_w = jax.random.split(key)
    x = jax.random.normal(k_x, (N, Cin, H, W), dtype=jnp.float32)
    w = jax.random.normal(k_w, (Cout, Cin, KH, KW), dtype=jnp.float32) * 0.1
    gamma = jnp.ones((Cout,), jnp.float32)    # nn.BatchNorm2d default init
    beta = jnp.zeros((Cout,), jnp.float32)

    fwd = jax.jit(conv_bn_relu, static_argnames=("padding", "row_tile"))

    # Default path: bf16 MXU operands, f32 accumulation / BN.  Compare against a
    # reference fed bf16-rounded operands so both sides see identical rounding.
    wband_bf16 = prepare_conv_weights(w, W, pad_w=1, compute_dtype=jnp.bfloat16)
    out_bf = jax.block_until_ready(fwd(x, wband_bf16, gamma, beta))
    ref_bf = jax.block_until_ready(reference(
        x.astype(jnp.bfloat16).astype(jnp.float32),
        w.astype(jnp.bfloat16).astype(jnp.float32), gamma, beta))
    assert out_bf.shape == (N, Cout, H, W)
    assert jnp.allclose(out_bf, ref_bf, atol=2e-3, rtol=2e-3), \
        f"bf16 max abs diff = {float(jnp.max(jnp.abs(out_bf - ref_bf)))}"

    # Full-f32 operand path vs the f32 reference.
    wband_f32 = prepare_conv_weights(w, W, pad_w=1, compute_dtype=jnp.float32)
    out_f32 = jax.block_until_ready(fwd(x, wband_f32, gamma, beta))
    ref_f32 = jax.block_until_ready(reference(x, w, gamma, beta))
    assert jnp.allclose(out_f32, ref_f32, atol=2e-3, rtol=2e-3), \
        f"f32 max abs diff = {float(jnp.max(jnp.abs(out_f32 - ref_f32)))}"

    print("KERNEL_OK")
</pallas_src>

<mosaic_0001>
module attributes {stable_mosaic.version = 11 : i64} {
  func.func @conv_stats_kernel(%arg0: i32, %arg1: i32, %arg2: memref<1x18x128xf32, #tpu.memory_space<vmem>>, %arg3: memref<3x128x128xbf16, #tpu.memory_space<vmem>>, %arg4: memref<16x128xf32, #tpu.memory_space<vmem>>, %arg5: memref<1x1x1x128xf32, #tpu.memory_space<vmem>>, %arg6: memref<1x1x1x128xf32, #tpu.memory_space<vmem>>) attributes {dimension_semantics = [#tpu.dimension_semantics<parallel>, #tpu.dimension_semantics<parallel>], iteration_bounds = array<i64: 2, 1>, scalar_prefetch = 0 : i64, scratch_operands = 0 : i64, tpu.core_type = #tpu.core_type<tc>, window_params = [{transform_indices = @transform_0, window_bounds = array<i64: 1, 18, 128>}, {pipeline_mode = #tpu.pipeline_mode<synchronous>, transform_indices = @transform_1, window_bounds = array<i64: 3, 128, 128>}, {transform_indices = @transform_2, window_bounds = array<i64: 16, 128>}, {transform_indices = @transform_3, window_bounds = array<i64: 1, 1, 1, 128>}, {transform_indices = @transform_4, window_bounds = array<i64: 1, 1, 1, 128>}]} {
    %c16_i32 = arith.constant 16 : i32
    %0 = arith.muli %arg1, %c16_i32 : i32
    %1 = tpu.assume_multiple %0, 8 : i32
    %c0 = arith.constant 0 : index
    %2 = arith.index_cast %1 : i32 to index
    %c0_0 = arith.constant 0 : index
    %3 = vector.load %arg2[%c0, %2, %c0_0] : memref<1x18x128xf32, #tpu.memory_space<vmem>>, vector<1x16x128xf32>
    %4 = vector.shape_cast %3 : vector<1x16x128xf32> to vector<16x128xf32>
    %5 = arith.truncf %4 : vector<16x128xf32> to vector<16x128xbf16>
    %c0_1 = arith.constant 0 : index
    %c0_2 = arith.constant 0 : index
    %c0_3 = arith.constant 0 : index
    %6 = vector.load %arg3[%c0_1, %c0_2, %c0_3] : memref<3x128x128xbf16, #tpu.memory_space<vmem>>, vector<1x128x128xbf16>
    %7 = vector.shape_cast %6 : vector<1x128x128xbf16> to vector<128x128xbf16>
    %cst = arith.constant dense<0.000000e+00> : vector<16x128xf32>
    %8 = tpu.matmul %5, %7, %cst {dimension_numbers = #tpu.dot_dimension_numbers<[1], [0], [0], [1], [0, 0, 1, 1], [], []>} : vector<16x128xbf16>, vector<128x128xbf16>, vector<16x128xf32> -> vector<16x128xf32>
    %c1_i32 = arith.constant 1 : i32
    %9 = arith.addi %1, %c1_i32 : i32
    %c0_4 = arith.constant 0 : index
    %10 = arith.index_cast %9 : i32 to index
    %c0_5 = arith.constant 0 : index
    %11 = vector.load %arg2[%c0_4, %10, %c0_5] : memref<1x18x128xf32, #tpu.memory_space<vmem>>, vector<1x16x128xf32>
    %12 = vector.shape_cast %11 : vector<1x16x128xf32> to vector<16x128xf32>
    %13 = arith.truncf %12 : vector<16x128xf32> to vector<16x128xbf16>
    %c1 = arith.constant 1 : index
    %c0_6 = arith.constant 0 : index
    %c0_7 = arith.constant 0 : index
    %14 = vector.load %arg3[%c1, %c0_6, %c0_7] : memref<3x128x128xbf16, #tpu.memory_space<vmem>>, vector<1x128x128xbf16>
    %15 = vector.shape_cast %14 : vector<1x128x128xbf16> to vector<128x128xbf16>
    %cst_8 = arith.constant dense<0.000000e+00> : vector<16x128xf32>
    %16 = tpu.matmul %13, %15, %cst_8 {dimension_numbers = #tpu.dot_dimension_numbers<[1], [0], [0], [1], [0, 0, 1, 1], [], []>} : vector<16x128xbf16>, vector<128x128xbf16>, vector<16x128xf32> -> vector<16x128xf32>
    %17 = arith.addf %8, %16 : vector<16x128xf32>
    %c2_i32 = arith.constant 2 : i32
    %18 = arith.addi %1, %c2_i32 : i32
    %c0_9 = arith.constant 0 : index
    %19 = arith.index_cast %18 : i32 to index
    %c0_10 = arith.constant 0 : index
    %20 = vector.load %arg2[%c0_9, %19, %c0_10] : memref<1x18x128xf32, #tpu.memory_space<vmem>>, vector<1x16x128xf32>
    %21 = vector.shape_cast %20 : vector<1x16x128xf32> to vector<16x128xf32>
    %22 = arith.truncf %21 : vector<16x128xf32> to vector<16x128xbf16>
    %c2 = arith.constant 2 : index
    %c0_11 = arith.constant 0 : index
    %c0_12 = arith.constant 0 : index
    %23 = vector.load %arg3[%c2, %c0_11, %c0_12] : memref<3x128x128xbf16, #tpu.memory_space<vmem>>, vector<1x128x128xbf16>
    %24 = vector.shape_cast %23 : vector<1x128x128xbf16> to vector<128x128xbf16>
    %cst_13 = arith.constant dense<0.000000e+00> : vector<16x128xf32>
    %25 = tpu.matmul %22, %24, %cst_13 {dimension_numbers = #tpu.dot_dimension_numbers<[1], [0], [0], [1], [0, 0, 1, 1], [], []>} : vector<16x128xbf16>, vector<128x128xbf16>, vector<16x128xf32> -> vector<16x128xf32>
    %26 = arith.addf %17, %25 : vector<16x128xf32>
    %c0_14 = arith.constant 0 : index
    %c0_15 = arith.constant 0 : index
    %27 = vector.load %arg4[%c0_14, %c0_15] : memref<16x128xf32, #tpu.memory_space<vmem>>, vector<16x128xf32>
    tpu.vector_store %arg4[%c0_14, %c0_15], %26 {strides = array<i32>} : memref<16x128xf32, #tpu.memory_space<vmem>>, vector<16x128xf32>,
    %cst_16 = arith.constant dense<0.000000e+00> : vector<128xf32>
    %28 = vector.multi_reduction <add>, %26, %cst_16 [0] : vector<16x128xf32> to vector<128xf32>
    %29 = vector.shape_cast %28 : vector<128xf32> to vector<1x128xf32>
    %c0_17 = arith.constant 0 : index
    %c0_18 = arith.constant 0 : index
    %c0_19 = arith.constant 0 : index
    %c0_20 = arith.constant 0 : index
    %30 = vector.load %arg5[%c0_17, %c0_18, %c0_19, %c0_20] : memref<1x1x1x128xf32, #tpu.memory_space<vmem>>, vector<1x1x1x128xf32>
    %31 = vector.shape_cast %30 : vector<1x1x1x128xf32> to vector<1x128xf32>
    %32 = vector.shape_cast %29 : vector<1x128xf32> to vector<1x1x1x128xf32>
    tpu.vector_store %arg5[%c0_17, %c0_18, %c0_19, %c0_20], %32 {strides = array<i32>} : memref<1x1x1x128xf32, #tpu.memory_space<vmem>>, vector<1x1x1x128xf32>,
    %33 = arith.mulf %26, %26 : vector<16x128xf32>
    %cst_21 = arith.constant dense<0.000000e+00> : vector<128xf32>
    %34 = vector.multi_reduction <add>, %33, %cst_21 [0] : vector<16x128xf32> to vector<128xf32>
    %35 = vector.shape_cast %34 : vector<128xf32> to vector<1x128xf32>
    %c0_22 = arith.constant 0 : index
    %c0_23 = arith.constant 0 : index
    %c0_24 = arith.constant 0 : index
    %c0_25 = arith.constant 0 : index
    %36 = vector.load %arg6[%c0_22, %c0_23, %c0_24, %c0_25] : memref<1x1x1x128xf32, #tpu.memory_space<vmem>>, vector<1x1x1x128xf32>
    %37 = vector.shape_cast %36 : vector<1x1x1x128xf32> to vector<1x128xf32>
    %38 = vector.shape_cast %35 : vector<1x128xf32> to vector<1x1x1x128xf32>
    tpu.vector_store %arg6[%c0_22, %c0_23, %c0_24, %c0_25], %38 {strides = array<i32>} : memref<1x1x1x128xf32, #tpu.memory_space<vmem>>, vector<1x1x1x128xf32>,
    return
  }
  func.func @transform_0(%arg0: i32, %arg1: i32) -> (i32, i32, i32) {
    %c0_i32 = arith.constant 0 : i32
    %c0_i32_0 = arith.constant 0 : i32
    %c0_i32_1 = arith.constant 0 : i32
    return %arg0, %c0_i32, %c0_i32_0 : i32, i32, i32
  }
  func.func @transform_1(%arg0: i32, %arg1: i32) -> (i32, i32, i32) {
    %c0_i32 = arith.constant 0 : i32
    %c0_i32_0 = arith.constant 0 : i32
    %c0_i32_1 = arith.constant 0 : i32
    %c0_i32_2 = arith.constant 0 : i32
    return %c0_i32, %c0_i32_0, %c0_i32_1 : i32, i32, i32
  }
  func.func @transform_2(%arg0: i32, %arg1: i32) -> (i32, i32) {
    %c1_i32 = arith.constant 1 : i32
    %0 = arith.muli %arg0, %c1_i32 : i32
    %1 = arith.addi %0, %arg1 : i32
    %c0_i32 = arith.constant 0 : i32
    %c0_i32_0 = arith.constant 0 : i32
    return %1, %c0_i32 : i32, i32
  }
  func.func @transform_3(%arg0: i32, %arg1: i32) -> (i32, i32, i32, i32) {
    %c0_i32 = arith.constant 0 : i32
    %c0_i32_0 = arith.constant 0 : i32
    %c0_i32_1 = arith.constant 0 : i32
    return %arg0, %arg1, %c0_i32, %c0_i32_0 : i32, i32, i32, i32
  }
  func.func @transform_4(%arg0: i32, %arg1: i32) -> (i32, i32, i32, i32) {
    %c0_i32 = arith.constant 0 : i32
    %c0_i32_0 = arith.constant 0 : i32
    %c0_i32_1 = arith.constant 0 : i32
    return %arg0, %arg1, %c0_i32, %c0_i32_0 : i32, i32, i32, i32
  }
}

module attributes {stable_mosaic.version = 11 : i64} {
  func.func @bn_relu_kernel(%arg0: i32, %arg1: memref<32x128xf32, #tpu.memory_space<vmem>>, %arg2: memref<1x128xf32, #tpu.memory_space<vmem>>, %arg3: memref<1x128xf32, #tpu.memory_space<vmem>>, %arg4: memref<32x128xf32, #tpu.memory_space<vmem>>) attributes {dimension_semantics = [#tpu.dimension_semantics<parallel>], iteration_bounds = array<i64: 1>, scalar_prefetch = 0 : i64, scratch_operands = 0 : i64, tpu.core_type = #tpu.core_type<tc>, window_params = [{transform_indices = @transform_0, window_bounds = array<i64: 32, 128>}, {pipeline_mode = #tpu.pipeline_mode<synchronous>, transform_indices = @transform_1, window_bounds = array<i64: 1, 128>}, {pipeline_mode = #tpu.pipeline_mode<synchronous>, transform_indices = @transform_2, window_bounds = array<i64: 1, 128>}, {transform_indices = @transform_3, window_bounds = array<i64: 32, 128>}]} {
    %c0 = arith.constant 0 : index
    %c0_0 = arith.constant 0 : index
    %0 = vector.load %arg1[%c0, %c0_0] : memref<32x128xf32, #tpu.memory_space<vmem>>, vector<32x128xf32>
    %c0_1 = arith.constant 0 : index
    %c0_2 = arith.constant 0 : index
    %1 = vector.load %arg2[%c0_1, %c0_2] : memref<1x128xf32, #tpu.memory_space<vmem>>, vector<1x128xf32>
    %2 = vector.broadcast %1 : vector<1x128xf32> to vector<32x128xf32>
    %3 = arith.mulf %0, %2 : vector<32x128xf32>
    %c0_3 = arith.constant 0 : index
    %c0_4 = arith.constant 0 : index
    %4 = vector.load %arg3[%c0_3, %c0_4] : memref<1x128xf32, #tpu.memory_space<vmem>>, vector<1x128xf32>
    %5 = vector.broadcast %4 : vector<1x128xf32> to vector<32x128xf32>
    %6 = arith.addf %3, %5 : vector<32x128xf32>
    %cst = arith.constant 0.000000e+00 : f32
    %7 = vector.broadcast %cst : f32 to vector<32x128xf32>
    %8 = arith.maximumf %6, %7 : vector<32x128xf32>
    %c0_5 = arith.constant 0 : index
    %c0_6 = arith.constant 0 : index
    %9 = vector.load %arg4[%c0_5, %c0_6] : memref<32x128xf32, #tpu.memory_space<vmem>>, vector<32x128xf32>
    tpu.vector_store %arg4[%c0_5, %c0_6], %8 {strides = array<i32>} : memref<32x128xf32, #tpu.memory_space<vmem>>, vector<32x128xf32>,
    return
  }
  func.func @transform_0(%arg0: i32) -> (i32, i32) {
    %c0_i32 = arith.constant 0 : i32
    %c0_i32_0 = arith.constant 0 : i32
    return %arg0, %c0_i32 : i32, i32
  }
  func.func @transform_1(%arg0: i32) -> (i32, i32) {
    %c0_i32 = arith.constant 0 : i32
    %c0_i32_0 = arith.constant 0 : i32
    %c0_i32_1 = arith.constant 0 : i32
    return %c0_i32, %c0_i32_0 : i32, i32
  }
  func.func @transform_2(%arg0: i32) -> (i32, i32) {
    %c0_i32 = arith.constant 0 : i32
    %c0_i32_0 = arith.constant 0 : i32
    %c0_i32_1 = arith.constant 0 : i32
    return %c0_i32, %c0_i32_0 : i32, i32
  }
  func.func @transform_3(%arg0: i32) -> (i32, i32) {
    %c0_i32 = arith.constant 0 : i32
    %c0_i32_0 = arith.constant 0 : i32
    return %arg0, %c0_i32 : i32, i32
  }
}

</mosaic_0001>

<llo_original>
// kernel: tile.18
$region0: #{tile.18}
  #allocation0 [shape = 's32[1]{0}', space=sflag, size = 0x4, scoped, tag = 'scoped memory for tile.18']
  %s0 = inlined_call_operand.vmem [shape: f32[8], index: 0, kind: input, shape index: {}]
  %s1 = inlined_call_operand.vmem [shape: f32[16,8], index: 1, kind: output, shape index: {}]
  // Predicated region
  $region2: #{tile.18} parent=0 // pred_check
    _
  $region3: #{tile.18} parent=0 // pred_check_branch
    %3 = sbr.rel (0) target = $region5
  $region4: #{tile.18} parent=0 // pred_region
    _
  $region5: #{tile.18} parent=0 // pred_fallthru
    _
  %v4 = vld [vmem:[%s0] ss:$0 sm:$0xff]
  %5 = vst [vmem:[%s1] sm:$0xff] %v4
  %s6 = scalar_lea.vmem %s1, 8
  %7 = vst [vmem:[%s6] sm:$0xff] %v4

// kernel: tile.19
$region0: #{tile.19}
  %s0 = inlined_call_operand.vmem [shape: f32[16,8], index: 0, kind: input, shape index: {}]
  %s1 = inlined_call_operand.vmem [shape: f32[1,128], index: 1, kind: output, shape index: {}]
  $region1: #{tile.19} parent=0
    #allocation0 [shape = 'u8[4096]{0}', space=vmem, size = 0x1000, scoped, tag = 'scoped mem for output reshape']
    %v2 = vld [vmem:[%s0] sm:$0x1]
    %vm3 = vcmask 64512
    %4 = vst.msk [vmem:[#allocation0] sm:$0x1] %vm3, %v2
    %s5 = scalar_lea.vmem %s0, 15
    %v6 = vld [vmem:[%s5] sm:$0x1]
    %7 = vrot.lane.b32.xlu0 %v6, 120
    %v8 = vpop.permute.xlu0 %7
    %vm9 = vcmask 1048512
    %10 = vst.msk [vmem:[#allocation0] sm:$0x1] %vm9, %v8
    %s11 = scalar_lea.vmem %s0, 14
    %v12 = vld [vmem:[%s11] sm:$0x1]
    %13 = vrot.lane.b32.xlu0 %v12, 112
    %v14 = vpop.permute.xlu0 %13
    %vm15 = vcmask 982912
    %16 = vst.msk [vmem:[#allocation0] sm:$0x1] %vm15, %v14
    %s17 = scalar_lea.vmem %s0, 13
    %v18 = vld [vmem:[%s17] sm:$0x1]
    %19 = vrot.lane.b32.xlu0 %v18, 104
    %v20 = vpop.permute.xlu0 %19
    %vm21 = vcmask 917312
    %22 = vst.msk [vmem:[#allocation0] sm:$0x1] %vm21, %v20
    %s23 = scalar_lea.vmem %s0, 12
    %v24 = vld [vmem:[%s23] sm:$0x1]
    %25 = vrot.lane.b32.xlu0 %v24, 96
    %v26 = vpop.permute.xlu0 %25
    %vm27 = vcmask 851712
    %28 = vst.msk [vmem:[#allocation0] sm:$0x1] %vm27, %v26
    %s29 = scalar_lea.vmem %s0, 11
    %v30 = vld [vmem:[%s29] sm:$0x1]
    %31 = vrot.lane.b32.xlu0 %v30, 88
    %v32 = vpop.permute.xlu0 %31
    %vm33 = vcmask 786112
    %34 = vst.msk [vmem:[#allocation0] sm:$0x1] %vm33, %v32
    %s35 = scalar_lea.vmem %s0, 10
    %v36 = vld [vmem:[%s35] sm:$0x1]
    %37 = vrot.lane.b32.xlu0 %v36, 80
    %v38 = vpop.permute.xlu0 %37
    %vm39 = vcmask 720512
    %40 = vst.msk [vmem:[#allocation0] sm:$0x1] %vm39, %v38
    %s41 = scalar_lea.vmem %s0, 9
    %v42 = vld [vmem:[%s41] sm:$0x1]
    %43 = vrot.lane.b32.xlu0 %v42, 72
    %v44 = vpop.permute.xlu0 %43
    %vm45 = vcmask 654912
    %46 = vst.msk [vmem:[#allocation0] sm:$0x1] %vm45, %v44
    %s47 = scalar_lea.vmem %s0, 8
    %v48 = vld [vmem:[%s47] sm:$0x1]
    %49 = vrot.lane.b32.xlu0 %v48, 64
    %v50 = vpop.permute.xlu0 %49
    %vm51 = vcmask 589312
    %52 = vst.msk [vmem:[#allocation0] sm:$0x1] %vm51, %v50
    %s53 = scalar_lea.vmem %s0, 7
    %v54 = vld [vmem:[%s53] sm:$0x1]
    %55 = vrot.lane.b32.xlu0 %v54, 56
    %v56 = vpop.permute.xlu0 %55
    %vm57 = vcmask 523712
    %58 = vst.msk [vmem:[#allocation0] sm:$0x1] %vm57, %v56
    %s59 = scalar_lea.vmem %s0, 6
    %v60 = vld [vmem:[%s59] sm:$0x1]
    %61 = vrot.lane.b32.xlu0 %v60, 48
    %v62 = vpop.permute.xlu0 %61
    %vm63 = vcmask 458112
    %64 = vst.msk [vmem:[#allocation0] sm:$0x1] %vm63, %v62
    %s65 = scalar_lea.vmem %s0, 5
    %v66 = vld [vmem:[%s65] sm:$0x1]
    %67 = vrot.lane.b32.xlu0 %v66, 40
    %v68 = vpop.permute.xlu0 %67
    %vm69 = vcmask 392512
    %70 = vst.msk [vmem:[#allocation0] sm:$0x1] %vm69, %v68
    %s71 = scalar_lea.vmem %s0, 4
    %v72 = vld [vmem:[%s71] sm:$0x1]
    %73 = vrot.lane.b32.xlu0 %v72, 32
    %v74 = vpop.permute.xlu0 %73
    %vm75 = vcmask 326912
    %76 = vst.msk [vmem:[#allocation0] sm:$0x1] %vm75, %v74
    %s77 = scalar_lea.vmem %s0, 3
    %v78 = vld [vmem:[%s77] sm:$0x1]
    %79 = vrot.lane.b32.xlu0 %v78, 24
    %v80 = vpop.permute.xlu0 %79
    %vm81 = vcmask 261312
    %82 = vst.msk [vmem:[#allocation0] sm:$0x1] %vm81, %v80
    %s83 = scalar_lea.vmem %s0, 2
    %v84 = vld [vmem:[%s83] sm:$0x1]
    %85 = vrot.lane.b32.xlu0 %v84, 16
    %v86 = vpop.permute.xlu0 %85
    %vm87 = vcmask 195712
    %88 = vst.msk [vmem:[#allocation0] sm:$0x1] %vm87, %v86
    %s89 = scalar_lea.vmem %s0, 1
    %v90 = vld [vmem:[%s89] sm:$0x1]
    %91 = vrot.lane.b32.xlu0 %v90, 8
    %v92 = vpop.permute.xlu0 %91
    %vm93 = vcmask 130112
    %94 = vst.msk [vmem:[#allocation0] sm:$0x1] %vm93, %v92
    %s96 = ssub.s32 2, 1
    %v97 = vld [vmem:[#allocation0] sm:%s96]
    %s99 = ssub.s32 2, 1
    %100 = vst [vmem:[%s1] sm:%s99] %v97

// kernel: conv_bn_relu.3
$region0: #{conv_bn_relu.3}
  #allocation0 [shape = 'u32[]', space=smem, size = 0x4, offset = 0x4, fixed_abs, tag = 'smem constant byte address 0x4 - core index']
  #allocation1 [shape = 'u32[72,128]{1,0:T(1,128)}', space=vmem, size = 0x9000, scoped, tag = 'internal scratch']
  %s0 = inlined_call_operand.vmem [shape: f32[32,128], index: 0, kind: input, shape index: {}, may-alias: {0,3}]
  %s1 = inlined_call_operand.vmem [shape: f32[1,128], index: 1, kind: input, shape index: {}]
  %s2 = inlined_call_operand.vmem [shape: f32[1,128], index: 2, kind: input, shape index: {}]
  %s3 = inlined_call_operand.vmem [shape: f32[32,128], index: 3, kind: output, shape index: {}, may-alias: {0,3}]
  %s4 = sld [smem:[#allocation0]]
  $region22: #{conv_bn_relu.3} parent=0
    _
  %s6 = ssub.s32 1, %s4
  %s7 = scalar_select 0, %s6, %s4
  // Predicated region
  $region2: #{conv_bn_relu.3} parent=0 // pred_check
    _
  $region3: #{conv_bn_relu.3} parent=0 // pred_check_branch
    %9 = sbr.rel (0) target = $region5
  $region4: #{conv_bn_relu.3} parent=0 // pred_region
    _
  $region5: #{conv_bn_relu.3} parent=0 // pred_fallthru
    _
  // Predicated region
  $region6: #{conv_bn_relu.3} parent=0 // pred_check
    _
  $region7: #{conv_bn_relu.3} parent=0 // pred_check_branch
    %11 = sbr.rel (0) target = $region9
  $region8: #{conv_bn_relu.3} parent=0 // pred_region
    _
  $region9: #{conv_bn_relu.3} parent=0 // pred_fallthru
    _
  // Predicated region
  $region10: #{conv_bn_relu.3} parent=0 // pred_check
    _
  $region11: #{conv_bn_relu.3} parent=0 // pred_check_branch
    %13 = sbr.rel (0) target = $region13
  $region12: #{conv_bn_relu.3} parent=0 // pred_region
    _
  $region13: #{conv_bn_relu.3} parent=0 // pred_fallthru
    _
  %v14 = vld [vmem:[%s0] sm:$0xff]
  %v15 = vld [vmem:[%s0 + $0x8] sm:$0xff]
  %v16 = vld [vmem:[%s0 + $0x10] sm:$0xff]
  %v17 = vld [vmem:[%s0 + $0x18] sm:$0xff]
  %v18 = vld [vmem:[%s1] sm:$0x1]
  %v20 = vperm.slane %v18, 0
  %v22 = vmul.f32 %v14, %v20
  %v23 = vmul.f32 %v15, %v20
  %v24 = vmul.f32 %v16, %v20
  %v25 = vmul.f32 %v17, %v20
  %v26 = vld [vmem:[%s2] sm:$0x1]
  %v28 = vperm.slane %v26, 0
  %v30 = vadd.f32 %v22, %v28
  %v31 = vadd.f32 %v23, %v28
  %v32 = vadd.f32 %v24, %v28
  %v33 = vadd.f32 %v25, %v28
  %v34 = vmax.f32 %v30, 0.0
  %v35 = vmax.f32 %v31, 0.0
  %v36 = vmax.f32 %v32, 0.0
  %v37 = vmax.f32 %v33, 0.0
  %38 = vst [vmem:[%s3] sm:$0xff] %v34
  %39 = vst [vmem:[%s3 + $0x8] sm:$0xff] %v35
  %40 = vst [vmem:[%s3 + $0x10] sm:$0xff] %v36
  %41 = vst [vmem:[%s3 + $0x18] sm:$0xff] %v37
  // Predicated region
  $region14: #{conv_bn_relu.3} parent=0 // pred_check
    _
  $region15: #{conv_bn_relu.3} parent=0 // pred_check_branch
    %43 = sbr.rel (0) target = $region17
  $region16: #{conv_bn_relu.3} parent=0 // pred_region
    _
  $region17: #{conv_bn_relu.3} parent=0 // pred_fallthru
    _
  // Predicated region
  $region18: #{conv_bn_relu.3} parent=0 // pred_check
    _
  $region19: #{conv_bn_relu.3} parent=0 // pred_check_branch
    %45 = sbr.rel (0) target = $region21
  $region20: #{conv_bn_relu.3} parent=0 // pred_region
    _
  $region21: #{conv_bn_relu.3} parent=0 // pred_fallthru
    _

// kernel: conv_bn_relu.2
$region0: #{conv_bn_relu.2}
  #allocation0 [shape = 'u32[]', space=smem, size = 0x4, offset = 0x4, fixed_abs, tag = 'smem constant byte address 0x4 - core index']
  #allocation1 [shape = 'u32[72,128]{1,0:T(1,128)}', space=vmem, size = 0x9000, scoped, tag = 'internal scratch']
  %s0 = inlined_call_operand.vmem [shape: f32[2,18,128], index: 0, kind: input, shape index: {}]
  %s1 = inlined_call_operand.vmem [shape: bf16[3,128,128], index: 1, kind: input, shape index: {}]
  %s2 = inlined_call_operand.vmem [shape: f32[32,128], index: 2, kind: output, shape index: {0}]
  %s3 = inlined_call_operand.vmem [shape: f32[2,1,1,128], index: 3, kind: output, shape index: {1}]
  %s4 = inlined_call_operand.vmem [shape: f32[2,1,1,128], index: 4, kind: output, shape index: {2}]
  %5 = xla_tuple %s2, %s3, %s4
  %s6 = sld [smem:[#allocation0]]
  $region57: #{conv_bn_relu.2} parent=0
    _
  %s8 = ssub.s32 1, %s6
  %s9 = scalar_select 0, %s8, %s6
  loop: start=0, step=1, limit=4
  $region2: #{conv_bn_relu.2} parent=0 // loop_pre_header
    _
  $region3: #{conv_bn_relu.2} parent=0 // loop_header
    %s11 = sphi 0, %s15
    %p12 = scmp.ge.s32.totalorder %s11, 4
    %s18 = sphi 0, %s30
    %s19 = sphi 0, %s26
    %s20 = sphi 0, %s18
    %s21 = sphi 0, %s19
    %s22 = sphi 0, %s20
    %s23 = sphi 0, %s21
    %s33 = sphi 0, %s35
    %s36 = sphi 0, %s33
    %s37 = sphi 0, %s36
    %s53 = sphi 0, %s37
    %s57 = sphi 0, %s57
    %s59 = sphi 0, %s57
    %s60 = sphi 0, %s59
    %s74 = sphi 0, %s60
    %s82 = sphi 0, %s84
    %s85 = sphi 0, %s82
    %s86 = sphi 0, %s85
    %s102 = sphi 0, %s86
    %s110 = sphi 0, %s112
    %s113 = sphi 0, %s110
    %s114 = sphi 0, %s113
    %s130 = sphi 0, %s114
    %s138 = sphi 0, %s140
    %s141 = sphi 0, %s138
    %s142 = sphi 0, %s141
    %s158 = sphi 0, %s142
  $region4: #{conv_bn_relu.2} parent=0 // loop_header_branch
    %14 = sbr.rel (%p12) target = $region8
  $region5: #{conv_bn_relu.2} parent=0 // loop_body
    %s16 = ssub.s32 %s11, 1
    %s17 = ssub.s32 %s11, 2
    %s24 = sadd.s32 1, %s19
    %p25 = scmp.ge.s32.totalorder %s24, 1
    %s26 = scalar_select %p25, 0, %s24
    %s27 = sadd.s32 1, %s18
    %s28 = scalar_select %p25, %s27, %s18
    %p29 = scmp.ge.s32.totalorder %s28, 2
    %s30 = scalar_select %p29, 0, %s28
    %s31 = ssub.s32 %s18, %s30
    %p32 = scmp.eq.s32.totalorder %s31, 0
    %s34 = sadd.s32 %s33, 1
    %s35 = scalar_select %p32, %s33, %s34
    %p38 = pneg %p32
    %p39 = scmp.eq.s32.totalorder %s11, 1
    %p40 = por %p38, %p39
    %p41 = scmp.ne.s32.totalorder %s33, %s36
    %p42 = scmp.eq.s32.totalorder %s11, 0
    %p43 = por %p41, %p42
    %p44 = scmp.ne.s32.totalorder %s33, %s36
    %p45 = scmp.eq.s32.totalorder %s16, 1
    %p46 = por %p44, %p45
    %p47 = scmp.ne.s32.totalorder %s36, %s37
    %p48 = scmp.eq.s32.totalorder %s16, 0
    %p49 = por %p47, %p48
    %p50 = scmp.ne.s32.totalorder %s36, %s37
    %p51 = scmp.eq.s32.totalorder %s17, 1
    %p52 = por %p50, %p51
    %p54 = scmp.ne.s32.totalorder %s37, %s53
    %p55 = scmp.eq.s32.totalorder %s17, 0
    %p56 = por %p54, %p55
    %s58 = sadd.s32 %s57, 1
    %p61 = scmp.eq.s32.totalorder %s11, 1
    %p62 = scmp.ne.s32.totalorder %s57, %s59
    %p63 = scmp.eq.s32.totalorder %s11, 0
    %p64 = por %p62, %p63
    %p65 = scmp.ne.s32.totalorder %s57, %s59
    %p66 = scmp.eq.s32.totalorder %s16, 1
    %p67 = por %p65, %p66
    %p68 = scmp.ne.s32.totalorder %s59, %s60
    %p69 = scmp.eq.s32.totalorder %s16, 0
    %p70 = por %p68, %p69
    %p71 = scmp.ne.s32.totalorder %s59, %s60
    %p72 = scmp.eq.s32.totalorder %s17, 1
    %p73 = por %p71, %p72
    %p75 = scmp.ne.s32.totalorder %s60, %s74
    %p76 = scmp.eq.s32.totalorder %s17, 0
    %p77 = por %p75, %p76
    %s78 = sadd.s32 %s18, %s19
    %s79 = sadd.s32 %s30, %s26
    %s80 = ssub.s32 %s78, %s79
    %p81 = scmp.eq.s32.totalorder %s80, 0
    %s83 = sadd.s32 %s82, 1
    %s84 = scalar_select %p81, %s82, %s83
    %p87 = pneg %p81
    %p88 = scmp.eq.s32.totalorder %s11, 1
    %p89 = por %p87, %p88
    %p90 = scmp.ne.s32.totalorder %s82, %s85
    %p91 = scmp.eq.s32.totalorder %s11, 0
    %p92 = por %p90, %p91
    %p93 = scmp.ne.s32.totalorder %s82, %s85
    %p94 = scmp.eq.s32.totalorder %s16, 1
    %p95 = por %p93, %p94
    %p96 = scmp.ne.s32.totalorder %s85, %s86
    %p97 = scmp.eq.s32.totalorder %s16, 0
    %p98 = por %p96, %p97
    %p99 = scmp.ne.s32.totalorder %s85, %s86
    %p100 = scmp.eq.s32.totalorder %s17, 1
    %p101 = por %p99, %p100
    %p103 = scmp.ne.s32.totalorder %s86, %s102
    %p104 = scmp.eq.s32.totalorder %s17, 0
    %p105 = por %p103, %p104
    %s106 = ssub.s32 %s18, %s30
    %s107 = ssub.s32 %s19, %s26
    %s108 = sor.u32 %s106, %s107
    %p109 = scmp.eq.s32.totalorder %s108, 0
    %s111 = sadd.s32 %s110, 1
    %s112 = scalar_select %p109, %s110, %s111
    %p115 = pneg %p109
    %p116 = scmp.eq.s32.totalorder %s11, 1
    %p117 = por %p115, %p116
    %p118 = scmp.ne.s32.totalorder %s110, %s113
    %p119 = scmp.eq.s32.totalorder %s11, 0
    %p120 = por %p118, %p119
    %p121 = scmp.ne.s32.totalorder %s110, %s113
    %p122 = scmp.eq.s32.totalorder %s16, 1
    %p123 = por %p121, %p122
    %p124 = scmp.ne.s32.totalorder %s113, %s114
    %p125 = scmp.eq.s32.totalorder %s16, 0
    %p126 = por %p124, %p125
    %p127 = scmp.ne.s32.totalorder %s113, %s114
    %p128 = scmp.eq.s32.totalorder %s17, 1
    %p129 = por %p127, %p128
    %p131 = scmp.ne.s32.totalorder %s114, %s130
    %p132 = scmp.eq.s32.totalorder %s17, 0
    %p133 = por %p131, %p132
    %s134 = ssub.s32 %s18, %s30
    %s135 = ssub.s32 %s19, %s26
    %s136 = sor.u32 %s134, %s135
    %p137 = scmp.eq.s32.totalorder %s136, 0
    %s139 = sadd.s32 %s138, 1
    %s140 = scalar_select %p137, %s138, %s139
    %p143 = pneg %p137
    %p144 = scmp.eq.s32.totalorder %s11, 1
    %p145 = por %p143, %p144
    %p146 = scmp.ne.s32.totalorder %s138, %s141
    %p147 = scmp.eq.s32.totalorder %s11, 0
    %p148 = por %p146, %p147
    %p149 = scmp.ne.s32.totalorder %s138, %s141
    %p150 = scmp.eq.s32.totalorder %s16, 1
    %p151 = por %p149, %p150
    %p152 = scmp.ne.s32.totalorder %s141, %s142
    %p153 = scmp.eq.s32.totalorder %s16, 0
    %p154 = por %p152, %p153
    %p155 = scmp.ne.s32.totalorder %s141, %s142
    %p156 = scmp.eq.s32.totalorder %s17, 1
    %p157 = por %p155, %p156
    %p159 = scmp.ne.s32.totalorder %s142, %s158
    %p160 = scmp.eq.s32.totalorder %s17, 0
    %p161 = por %p159, %p160
    %p162 = scmp.le.s32.totalorder 1, %s11
    %p163 = scmp.lt.s32.totalorder %s11, 3
    %p164 = pnand %p162, %p163
    %p165 = pneg %p164
    // Predicated region
    $region9: #{conv_bn_relu.2} parent=5 // pred_check
      _
    $region10: #{conv_bn_relu.2} parent=5 // pred_check_branch
      %167 = sbr.rel (%p164) target = $region12
    $region11: #{conv_bn_relu.2} parent=5 // pred_region
      %s168 = ssub.s32 %s11, 1
      // Predicated region
      $region13: #{conv_bn_relu.2} parent=11 // pred_check
        %p169 = pneg %p70
      $region14: #{conv_bn_relu.2} parent=11 // pred_check_branch
        %171 = sbr.rel (%p169) target = $region16
      $region15: #{conv_bn_relu.2} parent=11 // pred_region
        _
      $region16: #{conv_bn_relu.2} parent=11 // pred_fallthru
        _
    $region12: #{conv_bn_relu.2} parent=5 // pred_fallthru
      _
    %p172 = scmp.lt.s32.totalorder %s11, 2
    // Predicated region
    $region17: #{conv_bn_relu.2} parent=5 // pred_check
      %p173 = pneg %p172
    $region18: #{conv_bn_relu.2} parent=5 // pred_check_branch
      %175 = sbr.rel (%p173) target = $region20
    $region19: #{conv_bn_relu.2} parent=5 // pred_region
      // Predicated region
      $region21: #{conv_bn_relu.2} parent=19 // pred_check
        %p176 = pneg %p43
      $region22: #{conv_bn_relu.2} parent=19 // pred_check_branch
        %178 = sbr.rel (%p176) target = $region24
      $region23: #{conv_bn_relu.2} parent=19 // pred_region
        %p179 = scmp.lt.s32.totalorder %s18, 1
        %s180 = scalar_select %p179, %s18, 1
        %s181 = smul.addr %s180, 3
        %s182 = smul.addr %s181, 8
        %s183 = scalar_lea.vmem %s0, %s182
      $region24: #{conv_bn_relu.2} parent=19 // pred_fallthru
        _
    $region20: #{conv_bn_relu.2} parent=5 // pred_fallthru
      _
    %p184 = scmp.le.s32.totalorder 1, %s11
    %p185 = scmp.lt.s32.totalorder %s11, 3
    %p186 = pnand %p184, %p185
    %p187 = pneg %p186
    // Predicated region
    $region25: #{conv_bn_relu.2} parent=5 // pred_check
      _
    $region26: #{conv_bn_relu.2} parent=5 // pred_check_branch
      %189 = sbr.rel (%p186) target = $region28
    $region27: #{conv_bn_relu.2} parent=5 // pred_region
      %s190 = ssub.s32 %s11, 1
      %p191 = scmp.lt.s32.totalorder %s20, 1
      %s192 = scalar_select %p191, %s20, 1
      %s193 = smul.addr %s192, 3
      %s194 = smul.addr %s193, 8
      %s195 = scalar_lea.vmem %s0, %s194
      %p196 = pneg %p49
      %p197 = pneg %p46
      %p198 = pneg %p70
      %p199 = pneg %p67
      %p200 = pneg %p98
      %p201 = pneg %p95
      %s202 = sadd.s32 %s20, %s21
      %s203 = smul.u32 2, %s202
      %p204 = scmp.lt.s32.totalorder %s203, 3
      %s205 = scalar_select %p204, %s203, 3
      %s206 = smul.addr %s205, 8
      %s207 = scalar_lea.vmem %s2, %s206
      %p208 = pneg %p126
      %p209 = pneg %p123
      %p210 = scmp.lt.s32.totalorder %s20, 1
      %s211 = scalar_select %p210, %s20, 1
      %p212 = scmp.lt.s32.totalorder %s21, 0
      %s213 = scalar_select %p212, %s21, 0
      %s214 = sadd.s32 %s213, %s211
      %s215 = scalar_lea.vmem %s3, %s214
      %p216 = pneg %p154
      %p217 = pneg %p151
      %p218 = scmp.lt.s32.totalorder %s20, 1
      %s219 = scalar_select %p218, %s20, 1
      %p220 = scmp.lt.s32.totalorder %s21, 0
      %s221 = scalar_select %p220, %s21, 0
      %s222 = sadd.s32 %s221, %s219
      %s223 = scalar_lea.vmem %s4, %s222
      %p224 = scmp.lt.s32.totalorder %s20, 1
      %s225 = scalar_select %p224, %s20, 1
      %s226 = smul.addr %s225, 3
      %s227 = smul.addr %s226, 8
      %s228 = scalar_lea.vmem %s0, %s227
      %s229 = sadd.s32 %s20, %s21
      %s230 = smul.u32 2, %s229
      %p231 = scmp.lt.s32.totalorder %s230, 3
      %s232 = scalar_select %p231, %s230, 3
      %s233 = smul.addr %s232, 8
      %s234 = scalar_lea.vmem %s2, %s233
      %s235 = sadd.s32 %s20, %s21
      %s236 = smul.u32 2, %s235
      %p237 = scmp.lt.s32.totalorder %s20, 1
      %s238 = scalar_select %p237, %s20, 1
      %p239 = scmp.lt.s32.totalorder %s21, 0
      %s240 = scalar_select %p239, %s21, 0
      %s241 = sadd.s32 %s240, %s238
      %s242 = scalar_lea.vmem %s3, %s241
      %p243 = scmp.lt.s32.totalorder %s20, 1
      %s244 = scalar_select %p243, %s20, 1
      %p245 = scmp.lt.s32.totalorder %s21, 0
      %s246 = scalar_select %p245, %s21, 0
      %s247 = sadd.s32 %s246, %s244
      %s248 = scalar_lea.vmem %s4, %s247
      %s249 = smul.u32 %s21, 16
      %s250 = scalar_lea.vmem %s228, %s249
      %v251 = vld [vmem:[%s250] sm:$0xff]
      %v252 = vld [vmem:[%s250 + $0x8] sm:$0xff]
      %v253 = vpack.c.bf16 %v252, %v251
      %v254 = vld [vmem:[%s1] sm:$0xf]
      %v255 = vld [vmem:[%s1 + $0x4] sm:$0xf]
      %v256 = vld [vmem:[%s1 + $0x8] sm:$0xf]
      %v257 = vld [vmem:[%s1 + $0xc] sm:$0xf]
      %v258 = vld [vmem:[%s1 + $0x10] sm:$0xf]
      %v259 = vld [vmem:[%s1 + $0x14] sm:$0xf]
      %v260 = vld [vmem:[%s1 + $0x18] sm:$0xf]
      %v261 = vld [vmem:[%s1 + $0x1c] sm:$0xf]
      %v262 = vld [vmem:[%s1 + $0x20] sm:$0xf]
      %v263 = vld [vmem:[%s1 + $0x24] sm:$0xf]
      %v264 = vld [vmem:[%s1 + $0x28] sm:$0xf]
      %v265 = vld [vmem:[%s1 + $0x2c] sm:$0xf]
      %v266 = vld [vmem:[%s1 + $0x30] sm:$0xf]
      %v267 = vld [vmem:[%s1 + $0x34] sm:$0xf]
      %v268 = vld [vmem:[%s1 + $0x38] sm:$0xf]
      %v269 = vld [vmem:[%s1 + $0x3c] sm:$0xf]
      %s270 = sadd.s32 %s249, 1
      %s271 = scalar_lea.vmem %s228, %s270
      %v272 = vld [vmem:[%s271] sm:$0xff]
      %v273 = vld [vmem:[%s271 + $0x8] sm:$0xff]
      %v274 = vpack.c.bf16 %v273, %v272
      %s275 = scalar_lea.vmem %s1, 64
      %v276 = vld [vmem:[%s275] sm:$0xf]
      %v277 = vld [vmem:[%s275 + $0x4] sm:$0xf]
      %v278 = vld [vmem:[%s275 + $0x8] sm:$0xf]
      %v279 = vld [vmem:[%s275 + $0xc] sm:$0xf]
      %v280 = vld [vmem:[%s275 + $0x10] sm:$0xf]
      %v281 = vld [vmem:[%s275 + $0x14] sm:$0xf]
      %v282 = vld [vmem:[%s275 + $0x18] sm:$0xf]
      %v283 = vld [vmem:[%s275 + $0x1c] sm:$0xf]
      %v284 = vld [vmem:[%s275 + $0x20] sm:$0xf]
      %v285 = vld [vmem:[%s275 + $0x24] sm:$0xf]
      %v286 = vld [vmem:[%s275 + $0x28] sm:$0xf]
      %v287 = vld [vmem:[%s275 + $0x2c] sm:$0xf]
      %v288 = vld [vmem:[%s275 + $0x30] sm:$0xf]
      %v289 = vld [vmem:[%s275 + $0x34] sm:$0xf]
      %v290 = vld [vmem:[%s275 + $0x38] sm:$0xf]
      %v291 = vld [vmem:[%s275 + $0x3c] sm:$0xf]
      %v308 = vunpack.c.l.b16 %v276
      %v309 = vunpack.c.l.b16 %v277
      %v310 = vunpack.c.l.b16 %v278
      %v311 = vunpack.c.l.b16 %v279
      %v312 = vunpack.c.l.b16 %v280
      %v313 = vunpack.c.l.b16 %v281
      %v314 = vunpack.c.l.b16 %v282
      %v315 = vunpack.c.l.b16 %v283
      %v316 = vunpack.c.l.b16 %v284
      %v317 = vunpack.c.l.b16 %v285
      %v318 = vunpack.c.l.b16 %v286
      %v319 = vunpack.c.l.b16 %v287
      %v320 = vunpack.c.l.b16 %v288
      %v321 = vunpack.c.l.b16 %v289
      %v322 = vunpack.c.l.b16 %v290
      %v323 = vunpack.c.l.b16 %v291
      %v324 = vpack.c.b16 %v309, %v308
      %v325 = vpack.c.b16 %v311, %v310
      %v326 = vpack.c.b16 %v313, %v312
      %v327 = vpack.c.b16 %v315, %v314
      %v328 = vpack.c.b16 %v317, %v316
      %v329 = vpack.c.b16 %v319, %v318
      %v330 = vpack.c.b16 %v321, %v320
      %v331 = vpack.c.b16 %v323, %v322
      %340 = vmatpush.bf16.msra.mxu0 %v331
      %341 = vmatpush.bf16.msra.mxu0 %v330
      %342 = vmatpush.bf16.msra.mxu0 %v329
      %343 = vmatpush.bf16.msra.mxu0 %v328
      %344 = vmatpush.bf16.msra.mxu0 %v327
      %345 = vmatpush.bf16.msra.mxu0 %v326
      %346 = vmatpush.bf16.msra.mxu0 %v325
      %347 = vmatpush.bf16.msra.mxu0 %v324
      %348 = vmatmul.bf16.gmra.mxu0 %v274
      %v349 = vpop.f32.mrf.mxu0
      %v350 = vadd.f32 0.0, %v349
      %v351 = vpop.f32.mrf.mxu0
      %v352 = vadd.f32 0.0, %v351
      %353 = vdwg.mxu0
      %v370 = vunpack.c.l.b16 %v254
      %v371 = vunpack.c.l.b16 %v255
      %v372 = vunpack.c.l.b16 %v256
      %v373 = vunpack.c.l.b16 %v257
      %v374 = vunpack.c.l.b16 %v258
      %v375 = vunpack.c.l.b16 %v259
      %v376 = vunpack.c.l.b16 %v260
      %v377 = vunpack.c.l.b16 %v261
      %v378 = vunpack.c.l.b16 %v262
      %v379 = vunpack.c.l.b16 %v263
      %v380 = vunpack.c.l.b16 %v264
      %v381 = vunpack.c.l.b16 %v265
      %v382 = vunpack.c.l.b16 %v266
      %v383 = vunpack.c.l.b16 %v267
      %v384 = vunpack.c.l.b16 %v268
      %v385 = vunpack.c.l.b16 %v269
      %v386 = vpack.c.b16 %v371, %v370
      %v387 = vpack.c.b16 %v373, %v372
      %v388 = vpack.c.b16 %v375, %v374
      %v389 = vpack.c.b16 %v377, %v376
      %v390 = vpack.c.b16 %v379, %v378
      %v391 = vpack.c.b16 %v381, %v380
      %v392 = vpack.c.b16 %v383, %v382
      %v393 = vpack.c.b16 %v385, %v384
      %402 = vmatpush.bf16.msra.mxu0 %v393
      %403 = vmatpush.bf16.msra.mxu0 %v392
      %404 = vmatpush.bf16.msra.mxu0 %v391
      %405 = vmatpush.bf16.msra.mxu0 %v390
      %406 = vmatpush.bf16.msra.mxu0 %v389
      %407 = vmatpush.bf16.msra.mxu0 %v388
      %408 = vmatpush.bf16.msra.mxu0 %v387
      %409 = vmatpush.bf16.msra.mxu0 %v386
      %410 = vmatmul.bf16.gmra.mxu0 %v253
      %v411 = vpop.f32.mrf.mxu0
      %v412 = vadd.f32 %v350, %v411
      %v413 = vpop.f32.mrf.mxu0
      %v414 = vadd.f32 %v352, %v413
      %415 = vdwg.mxu0
      %s416 = sadd.s32 %s249, 2
      %s417 = scalar_lea.vmem %s228, %s416
      %v418 = vld [vmem:[%s417] sm:$0xff]
      %v419 = vld [vmem:[%s417 + $0x8] sm:$0xff]
      %v420 = vpack.c.bf16 %v419, %v418
      %s421 = scalar_lea.vmem %s1, 128
      %v422 = vld [vmem:[%s421] sm:$0xf]
      %v423 = vld [vmem:[%s421 + $0x4] sm:$0xf]
      %v424 = vld [vmem:[%s421 + $0x8] sm:$0xf]
      %v425 = vld [vmem:[%s421 + $0xc] sm:$0xf]
      %v426 = vld [vmem:[%s421 + $0x10] sm:$0xf]
      %v427 = vld [vmem:[%s421 + $0x14] sm:$0xf]
      %v428 = vld [vmem:[%s421 + $0x18] sm:$0xf]
      %v429 = vld [vmem:[%s421 + $0x1c] sm:$0xf]
      %v430 = vld [vmem:[%s421 + $0x20] sm:$0xf]
      %v431 = vld [vmem:[%s421 + $0x24] sm:$0xf]
      %v432 = vld [vmem:[%s421 + $0x28] sm:$0xf]
      %v433 = vld [vmem:[%s421 + $0x2c] sm:$0xf]
      %v434 = vld [vmem:[%s421 + $0x30] sm:$0xf]
      %v435 = vld [vmem:[%s421 + $0x34] sm:$0xf]
      %v436 = vld [vmem:[%s421 + $0x38] sm:$0xf]
      %v437 = vld [vmem:[%s421 + $0x3c] sm:$0xf]
      %v454 = vunpack.c.l.b16 %v422
      %v455 = vunpack.c.l.b16 %v423
      %v456 = vunpack.c.l.b16 %v424
      %v457 = vunpack.c.l.b16 %v425
      %v458 = vunpack.c.l.b16 %v426
      %v459 = vunpack.c.l.b16 %v427
      %v460 = vunpack.c.l.b16 %v428
      %v461 = vunpack.c.l.b16 %v429
      %v462 = vunpack.c.l.b16 %v430
      %v463 = vunpack.c.l.b16 %v431
      %v464 = vunpack.c.l.b16 %v432
      %v465 = vunpack.c.l.b16 %v433
      %v466 = vunpack.c.l.b16 %v434
      %v467 = vunpack.c.l.b16 %v435
      %v468 = vunpack.c.l.b16 %v436
      %v469 = vunpack.c.l.b16 %v437
      %v470 = vpack.c.b16 %v455, %v454
      %v471 = vpack.c.b16 %v457, %v456
      %v472 = vpack.c.b16 %v459, %v458
      %v473 = vpack.c.b16 %v461, %v460
      %v474 = vpack.c.b16 %v463, %v462
      %v475 = vpack.c.b16 %v465, %v464
      %v476 = vpack.c.b16 %v467, %v466
      %v477 = vpack.c.b16 %v469, %v468
      %486 = vmatpush.bf16.msra.mxu0 %v477
      %487 = vmatpush.bf16.msra.mxu0 %v476
      %488 = vmatpush.bf16.msra.mxu0 %v475
      %489 = vmatpush.bf16.msra.mxu0 %v474
      %490 = vmatpush.bf16.msra.mxu0 %v473
      %491 = vmatpush.bf16.msra.mxu0 %v472
      %492 = vmatpush.bf16.msra.mxu0 %v471
      %493 = vmatpush.bf16.msra.mxu0 %v470
      %494 = vmatmul.bf16.gmra.mxu0 %v420
      %v495 = vpop.f32.mrf.mxu0
      %v496 = vadd.f32 0.0, %v495
      %v497 = vpop.f32.mrf.mxu0
      %v498 = vadd.f32 0.0, %v497
      %499 = vdwg.mxu0
      %v500 = vadd.f32 %v412, %v496
      %v501 = vadd.f32 %v414, %v498
      %502 = vst [vmem:[%s234] sm:$0xff] %v500
      %503 = vst [vmem:[%s234 + $0x8] sm:$0xff] %v501
      %v504 = vadd.f32 %v500, %v501
      %v505 = vrot.slane %v504, 4
      %v506 = vadd.f32 %v504, %v505
      %v507 = vrot.slane %v506, 2
      %v508 = vadd.f32 %v506, %v507
      %v509 = vrot.slane %v508, 1
      %v510 = vadd.f32 %v508, %v509
      %511 = vst [vmem:[%s242] sm:$0x1] %v510
      %v512 = vmul.f32 %v500, %v500
      %v513 = vmul.f32 %v501, %v501
      %v514 = vadd.f32 %v512, %v513
      %v515 = vrot.slane %v514, 4
      %v516 = vadd.f32 %v514, %v515
      %v517 = vrot.slane %v516, 2
      %v518 = vadd.f32 %v516, %v517
      %v519 = vrot.slane %v518, 1
      %v520 = vadd.f32 %v518, %v519
      %521 = vst [vmem:[%s248] sm:$0x1] %v520
      %s522 = sadd.s32 %s20, %s21
      %s523 = smul.u32 2, %s522
      %p524 = scmp.lt.s32.totalorder %s523, 3
      %s525 = scalar_select %p524, %s523, 3
      %s526 = smul.addr %s525, 8
      %s527 = scalar_lea.vmem %s2, %s526
      %p528 = scmp.lt.s32.totalorder %s20, 1
      %s529 = scalar_select %p528, %s20, 1
      %p530 = scmp.lt.s32.totalorder %s21, 0
      %s531 = scalar_select %p530, %s21, 0
      %s532 = sadd.s32 %s531, %s529
      %s533 = scalar_lea.vmem %s3, %s532
      %p534 = scmp.lt.s32.totalorder %s20, 1
      %s535 = scalar_select %p534, %s20, 1
      %p536 = scmp.lt.s32.totalorder %s21, 0
      %s537 = scalar_select %p536, %s21, 0
      %s538 = sadd.s32 %s537, %s535
      %s539 = scalar_lea.vmem %s4, %s538
      // Predicated region
      $region29: #{conv_bn_relu.2} parent=27 // pred_check
        %p540 = pneg %p95
      $region30: #{conv_bn_relu.2} parent=27 // pred_check_branch
        %542 = sbr.rel (%p540) target = $region32
      $region31: #{conv_bn_relu.2} parent=27 // pred_region
        %s543 = sadd.s32 %s20, %s21
        %s544 = smul.u32 2, %s543
      $region32: #{conv_bn_relu.2} parent=27 // pred_fallthru
        _
      // Predicated region
      $region33: #{conv_bn_relu.2} parent=27 // pred_check
        %p545 = pneg %p123
      $region34: #{conv_bn_relu.2} parent=27 // pred_check_branch
        %547 = sbr.rel (%p545) target = $region36
      $region35: #{conv_bn_relu.2} parent=27 // pred_region
        _
      $region36: #{conv_bn_relu.2} parent=27 // pred_fallthru
        _
      // Predicated region
      $region37: #{conv_bn_relu.2} parent=27 // pred_check
        %p548 = pneg %p151
      $region38: #{conv_bn_relu.2} parent=27 // pred_check_branch
        %550 = sbr.rel (%p548) target = $region40
      $region39: #{conv_bn_relu.2} parent=27 // pred_region
        _
      $region40: #{conv_bn_relu.2} parent=27 // pred_fallthru
        _
    $region28: #{conv_bn_relu.2} parent=5 // pred_fallthru
      _
    %p551 = scmp.le.s32.totalorder 2, %s11
    // Predicated region
    $region41: #{conv_bn_relu.2} parent=5 // pred_check
      %p552 = pneg %p551
    $region42: #{conv_bn_relu.2} parent=5 // pred_check_branch
      %554 = sbr.rel (%p552) target = $region44
    $region43: #{conv_bn_relu.2} parent=5 // pred_region
      %s555 = ssub.s32 %s11, 2
      // Predicated region
      $region45: #{conv_bn_relu.2} parent=43 // pred_check
        %p556 = pneg %p101
      $region46: #{conv_bn_relu.2} parent=43 // pred_check_branch
        %558 = sbr.rel (%p556) target = $region48
      $region47: #{conv_bn_relu.2} parent=43 // pred_region
        %s559 = sadd.s32 %s22, %s23
        %s560 = smul.u32 2, %s559
        %p561 = scmp.lt.s32.totalorder %s560, 3
        %s562 = scalar_select %p561, %s560, 3
        %s563 = smul.addr %s562, 8
        %s564 = scalar_lea.vmem %s2, %s563
      $region48: #{conv_bn_relu.2} parent=43 // pred_fallthru
        _
      // Predicated region
      $region49: #{conv_bn_relu.2} parent=43 // pred_check
        %p565 = pneg %p129
      $region50: #{conv_bn_relu.2} parent=43 // pred_check_branch
        %567 = sbr.rel (%p565) target = $region52
      $region51: #{conv_bn_relu.2} parent=43 // pred_region
        %p568 = scmp.lt.s32.totalorder %s22, 1
        %s569 = scalar_select %p568, %s22, 1
        %p570 = scmp.lt.s32.totalorder %s23, 0
        %s571 = scalar_select %p570, %s23, 0
        %s572 = sadd.s32 %s571, %s569
        %s573 = scalar_lea.vmem %s3, %s572
      $region52: #{conv_bn_relu.2} parent=43 // pred_fallthru
        _
      // Predicated region
      $region53: #{conv_bn_relu.2} parent=43 // pred_check
        %p574 = pneg %p157
      $region54: #{conv_bn_relu.2} parent=43 // pred_check_branch
        %576 = sbr.rel (%p574) target = $region56
      $region55: #{conv_bn_relu.2} parent=43 // pred_region
        %p577 = scmp.lt.s32.totalorder %s22, 1
        %s578 = scalar_select %p577, %s22, 1
        %p579 = scmp.lt.s32.totalorder %s23, 0
        %s580 = scalar_select %p579, %s23, 0
        %s581 = sadd.s32 %s580, %s578
        %s582 = scalar_lea.vmem %s4, %s581
      $region56: #{conv_bn_relu.2} parent=43 // pred_fallthru
        _
    $region44: #{conv_bn_relu.2} parent=5 // pred_fallthru
      _
  $region6: #{conv_bn_relu.2} parent=0 // loop_footer
    %s15 = sadd.s32 1, %s11
  $region7: #{conv_bn_relu.2} parent=0 // loop_footer_branch
    %10 = sbr.rel target = $region3
  $region8: #{conv_bn_relu.2} parent=0 // loop_exit
    _

</llo_original>
